<compile_context>
chip_gen: v7x
topology: tpu7x:2x2x1
jax: 0.10.0
libtpu: 0.0.40
codegen_flags: <defaults>
</compile_context>

<pallas_src>
import functools

import jax
import jax.numpy as jnp
from jax.experimental import pallas as pl
from jax.experimental.pallas import tpu as pltpu


def _scale_kernel(x_ref, o_ref, *, s):
    # Pure elementwise multiply on a VMEM tile; `s` is a compile-time constant.
    o_ref[...] = x_ref[...] * s


def _sublane_multiple(dtype) -> int:
    # Second-to-last block dim must be a multiple of 8/16/32 for 4/2/1-byte dtypes.
    itemsize = jnp.dtype(dtype).itemsize
    return {4: 8, 2: 16, 1: 32}.get(itemsize, 8)


def scaling_layer(x: jax.Array, s) -> jax.Array:
    """Elementwise x * s, computed in a Pallas TPU kernel."""
    orig_shape = x.shape
    dtype = x.dtype
    total = x.size
    if total == 0:
        return x

    itemsize = jnp.dtype(dtype).itemsize
    sub = _sublane_multiple(dtype)

    # Pick the widest lane-dense last dim (multiple of 128) that divides the
    # element count exactly -> no padding, reshape is a free bitcast.
    cols = 0
    for cand in (4096, 2048, 1024, 512, 384, 256, 128):
        if total % cand == 0:
            cols = cand
            break

    if cols > 0:
        rows = total // cols
        x2d = x.reshape(rows, cols)
        needs_slice = False
    else:
        # Fallback for element counts not divisible by 128: minimal pad.
        # (Costs one extra copy; never hit by conv-style NCHW shapes.)
        cols = 128
        rows = pl.cdiv(total, cols)
        rows = pl.cdiv(rows, sub) * sub
        x2d = jnp.pad(jnp.ravel(x), (0, rows * cols - total)).reshape(rows, cols)
        needs_slice = True

    # Row tile sized to ~2 MiB (double-buffered in+out -> ~8 MiB resident).
    target_tile_bytes = 2 * 1024 * 1024
    tile_r = (target_tile_bytes // (cols * itemsize)) // sub * sub
    tile_r = max(sub, tile_r)
    if tile_r >= rows:
        tile_r = rows          # full-extent block: always a legal block shape
        grid_r = 1
    else:
        grid_r = pl.cdiv(rows, tile_r)   # partial last block handled by Pallas

    kernel = functools.partial(_scale_kernel, s=s)

    out2d = pl.pallas_call(
        kernel,
        out_shape=jax.ShapeDtypeStruct((rows, cols), dtype),
        grid=(grid_r,),
        in_specs=[pl.BlockSpec((tile_r, cols), lambda i: (i, 0))],
        out_specs=pl.BlockSpec((tile_r, cols), lambda i: (i, 0)),
        compiler_params=pltpu.CompilerParams(
            dimension_semantics=("parallel",),
            vmem_limit_bytes=32 * 1024 * 1024,
        ),
    )(x2d)

    if needs_slice:
        return out2d.reshape(-1)[:total].reshape(orig_shape)
    return out2d.reshape(orig_shape)


if __name__ == "__main__":
    key = jax.random.PRNGKey(0)
    # Small NCHW input consistent with a conv-style module: (N=2, C=4, H=16, W=16)
    x = jax.random.normal(key, (2, 4, 16, 16), dtype=jnp.float32)

    s = 2.5  # ScalingLayer(s=2.5); module default is s=1
    y = scaling_layer(x, s)
    jax.block_until_ready(y)

    ref = x * s
    assert y.shape == x.shape and y.dtype == x.dtype
    assert jnp.allclose(y, ref, atol=1e-6, rtol=1e-6)

    print("KERNEL_OK")
</pallas_src>

<mosaic_0001>
module attributes {stable_mosaic.version = 11 : i64} {
  func.func @_scale_kernel(%arg0: i32, %arg1: memref<1x2048xf32, #tpu.memory_space<vmem>>, %arg2: memref<1x2048xf32, #tpu.memory_space<vmem>>) attributes {dimension_semantics = [#tpu.dimension_semantics<parallel>], iteration_bounds = array<i64: 1>, scalar_prefetch = 0 : i64, scratch_operands = 0 : i64, tpu.core_type = #tpu.core_type<tc>, window_params = [{transform_indices = @transform_0, window_bounds = array<i64: 1, 2048>}, {transform_indices = @transform_1, window_bounds = array<i64: 1, 2048>}]} {
    %c0 = arith.constant 0 : index
    %c0_0 = arith.constant 0 : index
    %0 = vector.load %arg1[%c0, %c0_0] : memref<1x2048xf32, #tpu.memory_space<vmem>>, vector<1x2048xf32>
    %cst = arith.constant 2.500000e+00 : f32
    %1 = vector.broadcast %cst : f32 to vector<1x2048xf32>
    %2 = arith.mulf %0, %1 : vector<1x2048xf32>
    %c0_1 = arith.constant 0 : index
    %c0_2 = arith.constant 0 : index
    %3 = vector.load %arg2[%c0_1, %c0_2] : memref<1x2048xf32, #tpu.memory_space<vmem>>, vector<1x2048xf32>
    tpu.vector_store %arg2[%c0_1, %c0_2], %2 {strides = array<i32>} : memref<1x2048xf32, #tpu.memory_space<vmem>>, vector<1x2048xf32>,
    return
  }
  func.func @transform_0(%arg0: i32) -> (i32, i32) {
    %c0_i32 = arith.constant 0 : i32
    %c0_i32_0 = arith.constant 0 : i32
    return %arg0, %c0_i32 : i32, i32
  }
  func.func @transform_1(%arg0: i32) -> (i32, i32) {
    %c0_i32 = arith.constant 0 : i32
    %c0_i32_0 = arith.constant 0 : i32
    return %arg0, %c0_i32 : i32, i32
  }
}

</mosaic_0001>

<llo_original>
// kernel: tpu_custom_call.1
$region0: #{tpu_custom_call.1}
  #allocation0 [shape = 'u32[]', space=smem, size = 0x4, offset = 0x4, fixed_abs, tag = 'smem constant byte address 0x4 - core index']
  #allocation1 [shape = 'u32[144,128]{1,0:T(1,128)}', space=vmem, size = 0x12000, scoped, tag = 'internal scratch']
  %s0 = inlined_call_operand.hbm [shape: f32[1,2048], index: 0, kind: input, shape index: {}]
  %s1 = inlined_call_operand.hbm [shape: f32[1,2048], index: 1, kind: output, shape index: {}]
  %s2 = sld [smem:[#allocation0]]
  $region18: #{tpu_custom_call.1} parent=0
    _
  %s4 = ssub.s32 1, %s2
  %s5 = scalar_select 0, %s4, %s2
  $region1: #{tpu_custom_call.1} parent=0
    #allocation2 [shape = 'u8[8192]{0}', space=vmem, size = 0x2000, scoped, tag = 'input window, operand 0, single buffered']
    #allocation3 [shape = 's32[1]{0}', space=sflag, size = 0x4, scoped, tag = 'scoped memory for tpu_custom_call.1']
    #allocation4 [shape = 's32[1]{0}', space=sflag, size = 0x4, scoped, tag = 'scoped memory for tpu_custom_call.1']
    #allocation5 [shape = 'u8[8192]{0}', space=vmem, size = 0x2000, scoped, tag = 'output window, operand 0, single buffered']
    %6 = vsyncpa [#allocation3], 0
    %7 = vsyncpa [#allocation4], 0
    // Predicated region
    $region2: #{tpu_custom_call.1} parent=1 // pred_check
      _
    $region3: #{tpu_custom_call.1} parent=1 // pred_check_branch
      %9 = sbr.rel (0) target = $region5
    $region4: #{tpu_custom_call.1} parent=1 // pred_region
      %s11 = ssub.s32 256, 256
      %12 = vsyncadd [#allocation3], %s11
      %s14 = sshll.u32 [#allocation2], 4
      %s15 = int_to_ptr.vmem [resolvable:$true] %s14
      %17 = dma.hbm_to_vmem [thread:$0]  %s0, 256, %s15, [#allocation3]
    $region5: #{tpu_custom_call.1} parent=1 // pred_fallthru
      _
    // Predicated region
    $region6: #{tpu_custom_call.1} parent=1 // pred_check
      _
    $region7: #{tpu_custom_call.1} parent=1 // pred_check_branch
      %19 = sbr.rel (0) target = $region9
    $region8: #{tpu_custom_call.1} parent=1 // pred_region
      %20 = dma.done [#allocation3], 256
    $region9: #{tpu_custom_call.1} parent=1 // pred_fallthru
      _
    %v21 = vld [vmem:[#allocation2] sm:$0xff]
    %v22 = vld [vmem:[#allocation2 + $0x8] sm:$0xff]
    %v23 = vmul.f32 %v21, 2.5
    %v24 = vmul.f32 %v22, 2.5
    %25 = vst [vmem:[#allocation5] sm:$0xff] %v23
    %26 = vst [vmem:[#allocation5 + $0x8] sm:$0xff] %v24
    // Predicated region
    $region10: #{tpu_custom_call.1} parent=1 // pred_check
      _
    $region11: #{tpu_custom_call.1} parent=1 // pred_check_branch
      %28 = sbr.rel (0) target = $region13
    $region12: #{tpu_custom_call.1} parent=1 // pred_region
      %s30 = ssub.s32 256, 256
      %31 = vsyncadd [#allocation4], %s30
      %s33 = sshll.u32 [#allocation5], 4
      %s34 = int_to_ptr.vmem [resolvable:$true] %s33
      %36 = dma.vmem_to_hbm [thread:$0]  %s34, 256, %s1, [#allocation4]
    $region13: #{tpu_custom_call.1} parent=1 // pred_fallthru
      _
    // Predicated region
    $region14: #{tpu_custom_call.1} parent=1 // pred_check
      _
    $region15: #{tpu_custom_call.1} parent=1 // pred_check_branch
      %38 = sbr.rel (0) target = $region17
    $region16: #{tpu_custom_call.1} parent=1 // pred_region
      %39 = dma.done [#allocation4], 256
    $region17: #{tpu_custom_call.1} parent=1 // pred_fallthru
      _
    %40 = vsyncpa [#allocation3], 1
    %41 = vsyncpa [#allocation4], 1

</llo_original>
